<compile_context>
chip_gen: v6e
topology: v6e:2x2x1
jax: 0.10.0
libtpu: 0.0.40
codegen_flags: <defaults>
</compile_context>

<pallas_src>
import functools
import math

import jax
import jax.numpy as jnp
from jax.experimental import pallas as pl
from jax.experimental.pallas import tpu as pltpu

_LANE = 128


def _round_up(v, m):
    return ((v + m - 1) // m) * m


def _vmem_capacity_bytes():
    try:
        return int(pltpu.get_tpu_info().vmem_capacity_bytes)
    except Exception:
        return 64 << 20  # conservative fallback (v7x per-TC VMEM)


def _spec(shape, index_map, buffers=None):
    """BlockSpec, optionally with an explicit pipeline buffer count."""
    if buffers is None:
        return pl.BlockSpec(shape, index_map)
    return pl.BlockSpec(shape, index_map, pipeline_mode=pl.Buffered(buffers))


def _bn_scale_shift(y, gamma_ref, beta_ref, eps):
    """One-pass training-mode BatchNorm1d stats -> per-feature scale/shift."""
    inv_m = 1.0 / y.shape[0]
    mean = jnp.sum(y, axis=0, keepdims=True) * inv_m
    ex2 = jnp.sum(y * y, axis=0, keepdims=True) * inv_m
    var = jnp.maximum(ex2 - mean * mean, 0.0)       # clamp: cancellation guard
    scale = jax.lax.rsqrt(var + eps) * gamma_ref[...].astype(jnp.float32)
    shift = beta_ref[...].astype(jnp.float32) - mean * scale
    return scale, shift


# --------------------------------------------------------------------------- #
# Kernels                                                                      #
# --------------------------------------------------------------------------- #
def _dense_bn_resident_kernel(x_ref, w_ref, gamma_ref, beta_ref, o_ref, *,
                              eps, add_residual, tn):
    """Full x resident in VMEM; one column tile of the output per grid step."""
    j = pl.program_id(0)

    # MXU matmul: native input dtype, f32 accumulation.
    y = jnp.dot(x_ref[...], w_ref[...], preferred_element_type=jnp.float32)

    scale, shift = _bn_scale_shift(y, gamma_ref, beta_ref, eps)
    out = y * scale + shift

    if add_residual:
        # Residual columns come straight out of the already-resident x block.
        col = pl.multiple_of(j * tn, tn)
        out = out + x_ref[:, pl.ds(col, tn)].astype(jnp.float32)

    o_ref[...] = out.astype(o_ref.dtype)


def _dense_bn_ktiled_kernel(x_ref, w_ref, gamma_ref, beta_ref, *rest,
                            eps, add_residual, acc_in_output):
    """K-tiled matmul; f32 accumulation in o_ref (f32 out) or VMEM scratch."""
    if acc_in_output:
        if add_residual:
            xres_ref, o_ref = rest
        else:
            (o_ref,) = rest
        acc_ref = o_ref                 # output block is resident across k
    else:
        if add_residual:
            xres_ref, o_ref, acc_ref = rest
        else:
            o_ref, acc_ref = rest

    k = pl.program_id(1)

    @pl.when(k == 0)
    def _():
        acc_ref[...] = jnp.zeros_like(acc_ref)

    acc_ref[...] += jnp.dot(x_ref[...], w_ref[...],
                            preferred_element_type=jnp.float32)

    @pl.when(k == pl.num_programs(1) - 1)
    def _():
        y = acc_ref[...].astype(jnp.float32)
        scale, shift = _bn_scale_shift(y, gamma_ref, beta_ref, eps)
        out = y * scale + shift
        if add_residual:
            out = out + xres_ref[...].astype(jnp.float32)
        o_ref[...] = out.astype(o_ref.dtype)


# --------------------------------------------------------------------------- #
# Wrapper                                                                      #
# --------------------------------------------------------------------------- #
def dense_forward(x, weight, gamma, beta, *, eps=1e-5, tn=None, tk=None,
                  vmem_budget_bytes=None):
    """Pallas implementation of Dense.forward (bias='bn', training-mode BN)."""
    M, K = x.shape
    K2, N = weight.shape
    assert K == K2
    add_residual = (K == N)
    out_dtype = x.dtype
    acc_in_output = jnp.dtype(out_dtype) == jnp.dtype(jnp.float32)

    x_isz = jnp.dtype(x.dtype).itemsize
    w_isz = jnp.dtype(weight.dtype).itemsize
    o_isz = jnp.dtype(out_dtype).itemsize

    cap = _vmem_capacity_bytes()
    if vmem_budget_bytes is None:
        vmem_budget_bytes = int(cap * 0.7)          # planning budget
    vmem_limit_bytes = int(min(cap, max(vmem_budget_bytes, int(cap * 0.8))))

    # Lane-dense output tiling: pad N to a multiple of 128.
    Np = _round_up(N, _LANE)

    # tn candidates: big tiles for the 256-wide MXU / contiguous W DMA, but
    # require >=2 N tiles so v7x's second TensorCore gets work.
    if tn is not None:
        assert tn % _LANE == 0 and Np % tn == 0
        tn_cands = [tn]
    else:
        tn_cands = [c for c in (512, 256, 128) if Np % c == 0 and Np // c >= 2]
        if not tn_cands:
            tn_cands = [_LANE]                      # Np == 128: single tile

    Kp_res = Np if add_residual else K
    # Deeper W pipelining only pays when M is small (weight-stream bound, v5e).
    w_bufs_account = 3 if M <= 256 else 2

    def _epi_bytes(t):
        # f32 epilogue temporaries: y, out (+ residual cast).
        return (3 if add_residual else 2) * M * t * 4

    def _resident_bytes(t):
        return (M * Kp_res * x_isz                  # x single-buffered (const idx)
                + w_bufs_account * Kp_res * t * w_isz
                + 2 * M * t * o_isz
                + 4 * t * 4
                + _epi_bytes(t))

    # ---- Pick plan: full-x resident (1-D grid) vs K-tiled (2-D grid) -------- #
    use_ktiled = tk is not None
    tn_sel = None
    if not use_ktiled:
        for c in tn_cands:
            if _resident_bytes(c) <= vmem_budget_bytes:
                tn_sel = c
                break
        if tn_sel is None:
            use_ktiled = True
    if tn_sel is None:
        tn_sel = tn_cands[0]
    tn = tn_sel

    if not use_ktiled:
        Kp = Kp_res
    else:
        def _kt_bytes(t_k):
            b = (2 * M * t_k * x_isz + 2 * t_k * tn * w_isz
                 + 2 * M * tn * o_isz
                 + (0 if acc_in_output else M * tn * 4)
                 + _epi_bytes(tn))
            if add_residual:
                b += M * tn * x_isz                 # residual tile (single-buffered)
            return b

        if tk is None:
            k128 = _round_up(K, _LANE)
            tk = _LANE
            for cand in (1024, 512, 256):           # bigger tk: fewer acc steps/DMAs
                if cand <= k128 and _kt_bytes(cand) <= vmem_budget_bytes:
                    tk = cand
                    break
        assert tk % _LANE == 0
        Kp = _round_up(K, tk)
        if add_residual:
            # K == N and tk multiple of 128 => Kp >= Np, residual window is in x.
            assert Kp >= Np

    # ---- Zero-pad operands (padding never changes the valid output columns) - #
    xp = x if Kp == K else jnp.pad(x, ((0, 0), (0, Kp - K)))
    wp = weight
    if Kp != K or Np != N:
        wp = jnp.pad(weight, ((0, Kp - K), (0, Np - N)))
    gp2 = (gamma if Np == N
           else jnp.pad(gamma, (0, Np - N), constant_values=1.0)).reshape(1, Np)
    bp2 = (beta if Np == N else jnp.pad(beta, (0, Np - N))).reshape(1, Np)

    # HBM traffic estimate; K-tiled path re-streams the x K-tiles Np/tn times.
    if use_ktiled:
        x_hbm = (Np // tn) * M * Kp * x_isz + (M * Np * x_isz if add_residual else 0)
    else:
        x_hbm = M * Kp * x_isz
    cost = pl.CostEstimate(
        flops=2 * M * Kp * Np,
        transcendentals=0,
        bytes_accessed=x_hbm + Kp * Np * w_isz + M * Np * o_isz,
    )

    if not use_ktiled:
        n_tiles = Np // tn

        def _call(use_buffered):
            kernel = functools.partial(_dense_bn_resident_kernel, eps=eps,
                                       add_residual=add_residual, tn=tn)
            xb = 1 if use_buffered else None                       # const index map
            wb = 3 if (use_buffered and M <= 256 and n_tiles >= 3) else None
            return pl.pallas_call(
                kernel,
                out_shape=jax.ShapeDtypeStruct((M, Np), out_dtype),
                grid_spec=pltpu.PrefetchScalarGridSpec(
                    num_scalar_prefetch=0,
                    grid=(n_tiles,),
                    in_specs=[
                        _spec((M, Kp), lambda j: (0, 0), xb),      # x, fully resident
                        _spec((Kp, tn), lambda j: (0, j), wb),     # weight column tile
                        _spec((1, tn), lambda j: (0, j)),          # gamma tile
                        _spec((1, tn), lambda j: (0, j)),          # beta tile
                    ],
                    out_specs=pl.BlockSpec((M, tn), lambda j: (0, j)),
                ),
                compiler_params=pltpu.CompilerParams(
                    dimension_semantics=("parallel",),
                    vmem_limit_bytes=vmem_limit_bytes,
                ),
                cost_estimate=cost,
            )(xp, wp, gp2, bp2)
    else:
        def _call(use_buffered):
            kernel = functools.partial(_dense_bn_ktiled_kernel, eps=eps,
                                       add_residual=add_residual,
                                       acc_in_output=acc_in_output)
            jb = 1 if use_buffered else None       # blocks indexed by j only
            in_specs = [
                pl.BlockSpec((M, tk), lambda j, k: (0, k)),        # x K-tile
                pl.BlockSpec((tk, tn), lambda j, k: (k, j)),       # weight tile
                _spec((1, tn), lambda j, k: (0, j), jb),           # gamma tile
                _spec((1, tn), lambda j, k: (0, j), jb),           # beta tile
            ]
            operands = [xp, wp, gp2, bp2]
            if add_residual:
                in_specs.append(_spec((M, tn), lambda j, k: (0, j), jb))
                operands.append(xp)
            scratch = [] if acc_in_output else [pltpu.VMEM((M, tn), jnp.float32)]
            return pl.pallas_call(
                kernel,
                out_shape=jax.ShapeDtypeStruct((M, Np), out_dtype),
                grid_spec=pltpu.PrefetchScalarGridSpec(
                    num_scalar_prefetch=0,
                    grid=(Np // tn, Kp // tk),
                    in_specs=in_specs,
                    out_specs=pl.BlockSpec((M, tn), lambda j, k: (0, j)),
                    scratch_shapes=scratch,
                ),
                compiler_params=pltpu.CompilerParams(
                    dimension_semantics=("parallel", "arbitrary"),
                    vmem_limit_bytes=vmem_limit_bytes,
                ),
                cost_estimate=cost,
            )(*operands)

    try:
        out = _call(True)
    except Exception:
        # pipeline_mode=pl.Buffered(...) not available on this jax build —
        # retry with default (double-buffered) BlockSpecs.
        out = _call(False)

    # TODO(synk): very large batch (M not VMEM-resident) would need an M-tiled
    # two-pass (sum/sum-of-squares accumulate, then normalize+residual) variant;
    # M stays resident here.
    return out if Np == N else out[:, :N]


# --------------------------------------------------------------------------- #
# Reference & test                                                             #
# --------------------------------------------------------------------------- #
def reference_forward(x, weight, gamma, beta, eps=1e-5):
    """Pure-JAX reference matching PyTorch Dense.forward with training-mode BN."""
    y = jnp.dot(x, weight, preferred_element_type=jnp.float32,
                precision=jax.lax.Precision.HIGHEST)
    mean = jnp.mean(y, axis=0, keepdims=True)
    var = jnp.mean((y - mean) ** 2, axis=0, keepdims=True)
    y = (y - mean) / jnp.sqrt(var + eps)
    y = y * gamma[None, :].astype(jnp.float32) + beta[None, :].astype(jnp.float32)
    if x.shape[1] == weight.shape[1]:
        y = y + x.astype(jnp.float32)
    return y.astype(x.dtype)


if __name__ == "__main__":
    key = jax.random.PRNGKey(0)

    def make_inputs(k, batch, in_features, out_features, dtype=jnp.float32):
        kx, kw = jax.random.split(k)
        x = jax.random.normal(kx, (batch, in_features), dtype=dtype)
        stdv = 1.0 / math.sqrt(out_features)   # reset_parameters(): U(-stdv, stdv)
        w = jax.random.uniform(kw, (in_features, out_features), dtype=dtype,
                               minval=-stdv, maxval=stdv)
        gamma = jnp.ones((out_features,), dtype=dtype)   # fresh BatchNorm1d
        beta = jnp.zeros((out_features,), dtype=dtype)
        return x, w, gamma, beta

    # 1) Module-sized case (residual, K == N): resident plan, lane-padded to 128.
    x, w, g, b = make_inputs(key, 8, 32, 32)
    out = jax.block_until_ready(dense_forward(x, w, g, b))
    ref = reference_forward(x, w, g, b)
    assert out.shape == (8, 32)
    assert jnp.allclose(out, ref, atol=1e-3, rtol=1e-3), "resident/residual mismatch"

    # 2) Non-residual case, K-tiled path (grid (3, 2)); f32 accumulates in o_ref.
    k2 = jax.random.fold_in(key, 1)
    x, w, g, b = make_inputs(k2, 16, 256, 384)
    out = jax.block_until_ready(dense_forward(x, w, g, b, tk=128))
    ref = reference_forward(x, w, g, b)
    assert out.shape == (16, 384)
    assert jnp.allclose(out, ref, atol=1e-3, rtol=1e-3), "ktiled mismatch"

    # 3) Residual case, K-tiled path, in-place f32 output accumulation (grid (2, 2)).
    k3 = jax.random.fold_in(key, 2)
    x, w, g, b = make_inputs(k3, 16, 256, 256)
    out = jax.block_until_ready(dense_forward(x, w, g, b, tk=128))
    ref = reference_forward(x, w, g, b)
    assert out.shape == (16, 256)
    assert jnp.allclose(out, ref, atol=1e-3, rtol=1e-3), "ktiled/residual mismatch"

    # 4) bf16 inputs: K-tiled path exercising the f32 VMEM scratch accumulator.
    k4 = jax.random.fold_in(key, 3)
    x, w, g, b = make_inputs(k4, 16, 256, 256, dtype=jnp.bfloat16)
    out = jax.block_until_ready(dense_forward(x, w, g, b, tk=128))
    ref = reference_forward(x, w, g, b)
    assert out.shape == (16, 256)
    assert jnp.allclose(out.astype(jnp.float32), ref.astype(jnp.float32),
                        atol=5e-2, rtol=5e-2), "bf16 ktiled/scratch mismatch"

    print("KERNEL_OK")
</pallas_src>

<mosaic_0001>
module attributes {stable_mosaic.version = 11 : i64} {
  func.func @_dense_bn_resident_kernel(%arg0: i32, %arg1: memref<8x128xf32, #tpu.memory_space<vmem>>, %arg2: memref<128x128xf32, #tpu.memory_space<vmem>>, %arg3: memref<1x128xf32, #tpu.memory_space<vmem>>, %arg4: memref<1x128xf32, #tpu.memory_space<vmem>>, %arg5: memref<8x128xf32, #tpu.memory_space<vmem>>) attributes {dimension_semantics = [#tpu.dimension_semantics<parallel>], iteration_bounds = array<i64: 1>, scalar_prefetch = 0 : i64, scratch_operands = 0 : i64, tpu.core_type = #tpu.core_type<tc>, window_params = [{pipeline_mode = #tpu.pipeline_mode<synchronous>, transform_indices = @transform_0, window_bounds = array<i64: 8, 128>}, {transform_indices = @transform_1, window_bounds = array<i64: 128, 128>}, {transform_indices = @transform_2, window_bounds = array<i64: 1, 128>}, {transform_indices = @transform_3, window_bounds = array<i64: 1, 128>}, {transform_indices = @transform_4, window_bounds = array<i64: 8, 128>}]} {
    %c0 = arith.constant 0 : index
    %c0_0 = arith.constant 0 : index
    %0 = vector.load %arg1[%c0, %c0_0] : memref<8x128xf32, #tpu.memory_space<vmem>>, vector<8x128xf32>
    %c0_1 = arith.constant 0 : index
    %c0_2 = arith.constant 0 : index
    %1 = vector.load %arg2[%c0_1, %c0_2] : memref<128x128xf32, #tpu.memory_space<vmem>>, vector<128x128xf32>
    %cst = arith.constant dense<0.000000e+00> : vector<8x128xf32>
    %2 = tpu.matmul %0, %1, %cst {dimension_numbers = #tpu.dot_dimension_numbers<[1], [0], [0], [1], [0, 0, 1, 1], [], []>} : vector<8x128xf32>, vector<128x128xf32>, vector<8x128xf32> -> vector<8x128xf32>
    %cst_3 = arith.constant dense<0.000000e+00> : vector<128xf32>
    %3 = vector.multi_reduction <add>, %2, %cst_3 [0] : vector<8x128xf32> to vector<128xf32>
    %4 = vector.shape_cast %3 : vector<128xf32> to vector<1x128xf32>
    %cst_4 = arith.constant 1.250000e-01 : f32
    %5 = vector.broadcast %cst_4 : f32 to vector<1x128xf32>
    %6 = arith.mulf %4, %5 : vector<1x128xf32>
    %7 = arith.mulf %2, %2 : vector<8x128xf32>
    %cst_5 = arith.constant dense<0.000000e+00> : vector<128xf32>
    %8 = vector.multi_reduction <add>, %7, %cst_5 [0] : vector<8x128xf32> to vector<128xf32>
    %9 = vector.shape_cast %8 : vector<128xf32> to vector<1x128xf32>
    %cst_6 = arith.constant 1.250000e-01 : f32
    %10 = vector.broadcast %cst_6 : f32 to vector<1x128xf32>
    %11 = arith.mulf %9, %10 : vector<1x128xf32>
    %12 = arith.mulf %6, %6 : vector<1x128xf32>
    %13 = arith.subf %11, %12 : vector<1x128xf32>
    %cst_7 = arith.constant 0.000000e+00 : f32
    %14 = vector.broadcast %cst_7 : f32 to vector<1x128xf32>
    %15 = arith.maximumf %13, %14 : vector<1x128xf32>
    %cst_8 = arith.constant 9.99999974E-6 : f32
    %16 = vector.broadcast %cst_8 : f32 to vector<1x128xf32>
    %17 = arith.addf %15, %16 : vector<1x128xf32>
    %18 = math.rsqrt %17 : vector<1x128xf32>
    %c0_9 = arith.constant 0 : index
    %c0_10 = arith.constant 0 : index
    %19 = vector.load %arg3[%c0_9, %c0_10] : memref<1x128xf32, #tpu.memory_space<vmem>>, vector<1x128xf32>
    %20 = arith.mulf %18, %19 : vector<1x128xf32>
    %c0_11 = arith.constant 0 : index
    %c0_12 = arith.constant 0 : index
    %21 = vector.load %arg4[%c0_11, %c0_12] : memref<1x128xf32, #tpu.memory_space<vmem>>, vector<1x128xf32>
    %22 = arith.mulf %6, %20 : vector<1x128xf32>
    %23 = arith.subf %21, %22 : vector<1x128xf32>
    %24 = vector.broadcast %20 : vector<1x128xf32> to vector<8x128xf32>
    %25 = arith.mulf %2, %24 : vector<8x128xf32>
    %26 = vector.broadcast %23 : vector<1x128xf32> to vector<8x128xf32>
    %27 = arith.addf %25, %26 : vector<8x128xf32>
    %c128_i32 = arith.constant 128 : i32
    %28 = arith.muli %arg0, %c128_i32 : i32
    %29 = tpu.assume_multiple %28, 128 : i32
    %c0_13 = arith.constant 0 : index
    %30 = arith.index_cast %29 : i32 to index
    %31 = vector.load %arg1[%c0_13, %30] : memref<8x128xf32, #tpu.memory_space<vmem>>, vector<8x128xf32>
    %32 = arith.addf %27, %31 : vector<8x128xf32>
    %c0_14 = arith.constant 0 : index
    %c0_15 = arith.constant 0 : index
    %33 = vector.load %arg5[%c0_14, %c0_15] : memref<8x128xf32, #tpu.memory_space<vmem>>, vector<8x128xf32>
    tpu.vector_store %arg5[%c0_14, %c0_15], %32 {strides = array<i32>} : memref<8x128xf32, #tpu.memory_space<vmem>>, vector<8x128xf32>,
    return
  }
  func.func @transform_0(%arg0: i32) -> (i32, i32) {
    %c0_i32 = arith.constant 0 : i32
    %c0_i32_0 = arith.constant 0 : i32
    %c0_i32_1 = arith.constant 0 : i32
    return %c0_i32, %c0_i32_0 : i32, i32
  }
  func.func @transform_1(%arg0: i32) -> (i32, i32) {
    %c0_i32 = arith.constant 0 : i32
    %c0_i32_0 = arith.constant 0 : i32
    return %c0_i32, %arg0 : i32, i32
  }
  func.func @transform_2(%arg0: i32) -> (i32, i32) {
    %c0_i32 = arith.constant 0 : i32
    %c0_i32_0 = arith.constant 0 : i32
    return %c0_i32, %arg0 : i32, i32
  }
  func.func @transform_3(%arg0: i32) -> (i32, i32) {
    %c0_i32 = arith.constant 0 : i32
    %c0_i32_0 = arith.constant 0 : i32
    return %c0_i32, %arg0 : i32, i32
  }
  func.func @transform_4(%arg0: i32) -> (i32, i32) {
    %c0_i32 = arith.constant 0 : i32
    %c0_i32_0 = arith.constant 0 : i32
    return %c0_i32, %arg0 : i32, i32
  }
}

module attributes {stable_mosaic.version = 11 : i64} {
  func.func @_dense_bn_resident_kernel(%arg0: i32, %arg1: memref<8x128xf32, #tpu.memory_space<vmem>>, %arg2: memref<128x128xf32, #tpu.memory_space<vmem>>, %arg3: memref<1x128xf32, #tpu.memory_space<vmem>>, %arg4: memref<1x128xf32, #tpu.memory_space<vmem>>, %arg5: memref<8x128xf32, #tpu.memory_space<vmem>>) attributes {dimension_semantics = [#tpu.dimension_semantics<parallel>], iteration_bounds = array<i64: 1>, scalar_prefetch = 0 : i64, scratch_operands = 0 : i64, tpu.core_type = #tpu.core_type<tc>, window_params = [{pipeline_mode = #tpu.pipeline_mode<synchronous>, transform_indices = @transform_0, window_bounds = array<i64: 8, 128>}, {transform_indices = @transform_1, window_bounds = array<i64: 128, 128>}, {transform_indices = @transform_2, window_bounds = array<i64: 1, 128>}, {transform_indices = @transform_3, window_bounds = array<i64: 1, 128>}, {transform_indices = @transform_4, window_bounds = array<i64: 8, 128>}]} {
    %c0 = arith.constant 0 : index
    %c0_0 = arith.constant 0 : index
    %0 = vector.load %arg1[%c0, %c0_0] : memref<8x128xf32, #tpu.memory_space<vmem>>, vector<8x128xf32>
    %c0_1 = arith.constant 0 : index
    %c0_2 = arith.constant 0 : index
    %1 = vector.load %arg2[%c0_1, %c0_2] : memref<128x128xf32, #tpu.memory_space<vmem>>, vector<128x128xf32>
    %cst = arith.constant dense<0.000000e+00> : vector<8x128xf32>
    %2 = tpu.matmul %0, %1, %cst {dimension_numbers = #tpu.dot_dimension_numbers<[1], [0], [0], [1], [0, 0, 1, 1], [], []>} : vector<8x128xf32>, vector<128x128xf32>, vector<8x128xf32> -> vector<8x128xf32>
    %cst_3 = arith.constant dense<0.000000e+00> : vector<128xf32>
    %3 = vector.multi_reduction <add>, %2, %cst_3 [0] : vector<8x128xf32> to vector<128xf32>
    %4 = vector.shape_cast %3 : vector<128xf32> to vector<1x128xf32>
    %cst_4 = arith.constant 1.250000e-01 : f32
    %5 = vector.broadcast %cst_4 : f32 to vector<1x128xf32>
    %6 = arith.mulf %4, %5 : vector<1x128xf32>
    %7 = arith.mulf %2, %2 : vector<8x128xf32>
    %cst_5 = arith.constant dense<0.000000e+00> : vector<128xf32>
    %8 = vector.multi_reduction <add>, %7, %cst_5 [0] : vector<8x128xf32> to vector<128xf32>
    %9 = vector.shape_cast %8 : vector<128xf32> to vector<1x128xf32>
    %cst_6 = arith.constant 1.250000e-01 : f32
    %10 = vector.broadcast %cst_6 : f32 to vector<1x128xf32>
    %11 = arith.mulf %9, %10 : vector<1x128xf32>
    %12 = arith.mulf %6, %6 : vector<1x128xf32>
    %13 = arith.subf %11, %12 : vector<1x128xf32>
    %cst_7 = arith.constant 0.000000e+00 : f32
    %14 = vector.broadcast %cst_7 : f32 to vector<1x128xf32>
    %15 = arith.maximumf %13, %14 : vector<1x128xf32>
    %cst_8 = arith.constant 9.99999974E-6 : f32
    %16 = vector.broadcast %cst_8 : f32 to vector<1x128xf32>
    %17 = arith.addf %15, %16 : vector<1x128xf32>
    %18 = math.rsqrt %17 : vector<1x128xf32>
    %c0_9 = arith.constant 0 : index
    %c0_10 = arith.constant 0 : index
    %19 = vector.load %arg3[%c0_9, %c0_10] : memref<1x128xf32, #tpu.memory_space<vmem>>, vector<1x128xf32>
    %20 = arith.mulf %18, %19 : vector<1x128xf32>
    %c0_11 = arith.constant 0 : index
    %c0_12 = arith.constant 0 : index
    %21 = vector.load %arg4[%c0_11, %c0_12] : memref<1x128xf32, #tpu.memory_space<vmem>>, vector<1x128xf32>
    %22 = arith.mulf %6, %20 : vector<1x128xf32>
    %23 = arith.subf %21, %22 : vector<1x128xf32>
    %24 = vector.broadcast %20 : vector<1x128xf32> to vector<8x128xf32>
    %25 = arith.mulf %2, %24 : vector<8x128xf32>
    %26 = vector.broadcast %23 : vector<1x128xf32> to vector<8x128xf32>
    %27 = arith.addf %25, %26 : vector<8x128xf32>
    %c128_i32 = arith.constant 128 : i32
    %28 = arith.muli %arg0, %c128_i32 : i32
    %29 = tpu.assume_multiple %28, 128 : i32
    %c0_13 = arith.constant 0 : index
    %30 = arith.index_cast %29 : i32 to index
    %31 = vector.load %arg1[%c0_13, %30] : memref<8x128xf32, #tpu.memory_space<vmem>>, vector<8x128xf32>
    %32 = arith.addf %27, %31 : vector<8x128xf32>
    %c0_14 = arith.constant 0 : index
    %c0_15 = arith.constant 0 : index
    %33 = vector.load %arg5[%c0_14, %c0_15] : memref<8x128xf32, #tpu.memory_space<vmem>>, vector<8x128xf32>
    tpu.vector_store %arg5[%c0_14, %c0_15], %32 {strides = array<i32>} : memref<8x128xf32, #tpu.memory_space<vmem>>, vector<8x128xf32>,
    return
  }
  func.func @transform_0(%arg0: i32) -> (i32, i32) {
    %c0_i32 = arith.constant 0 : i32
    %c0_i32_0 = arith.constant 0 : i32
    %c0_i32_1 = arith.constant 0 : i32
    return %c0_i32, %c0_i32_0 : i32, i32
  }
  func.func @transform_1(%arg0: i32) -> (i32, i32) {
    %c0_i32 = arith.constant 0 : i32
    %c0_i32_0 = arith.constant 0 : i32
    return %c0_i32, %arg0 : i32, i32
  }
  func.func @transform_2(%arg0: i32) -> (i32, i32) {
    %c0_i32 = arith.constant 0 : i32
    %c0_i32_0 = arith.constant 0 : i32
    return %c0_i32, %arg0 : i32, i32
  }
  func.func @transform_3(%arg0: i32) -> (i32, i32) {
    %c0_i32 = arith.constant 0 : i32
    %c0_i32_0 = arith.constant 0 : i32
    return %c0_i32, %arg0 : i32, i32
  }
  func.func @transform_4(%arg0: i32) -> (i32, i32) {
    %c0_i32 = arith.constant 0 : i32
    %c0_i32_0 = arith.constant 0 : i32
    return %c0_i32, %arg0 : i32, i32
  }
}

</mosaic_0001>

<llo_original>
// kernel: tpu_custom_call.1
$region0: #{tpu_custom_call.1}
  #allocation0 [shape = 'u32[]', space=smem, size = 0x4, offset = 0x4, fixed_abs, tag = 'smem constant byte address 0x4 - core index']
  #allocation1 [shape = 'u32[144,128]{1,0:T(1,128)}', space=vmem, size = 0x12000, scoped, tag = 'internal scratch']
  %s0 = inlined_call_operand.hbm [shape: f32[8,128], index: 0, kind: input, shape index: {}]
  %s1 = inlined_call_operand.hbm [shape: f32[128,128], index: 1, kind: input, shape index: {}]
  %s2 = inlined_call_operand.vmem [shape: f32[1,128], index: 2, kind: input, shape index: {}]
  %s3 = inlined_call_operand.vmem [shape: f32[1,128], index: 3, kind: input, shape index: {}]
  %s4 = inlined_call_operand.hbm [shape: f32[8,128], index: 4, kind: output, shape index: {}]
  %s5 = sld [smem:[#allocation0]]
  $region34: #{tpu_custom_call.1} parent=0
    _
  %s7 = ssub.s32 1, %s5
  %s8 = scalar_select 0, %s7, %s5
  $region1: #{tpu_custom_call.1} parent=0
    #allocation2 [shape = 'u8[4096]{0}', space=vmem, size = 0x1000, scoped, tag = 'input window, operand 0, single buffered']
    #allocation3 [shape = 's32[1]{0}', space=sflag, size = 0x4, scoped, tag = 'scoped memory for tpu_custom_call.1']
    #allocation4 [shape = 's32[1]{0}', space=sflag, size = 0x4, scoped, tag = 'scoped memory for tpu_custom_call.1']
    #allocation5 [shape = 'u8[65536]{0}', space=vmem, size = 0x10000, scoped, tag = 'input window, operand 1, single buffered']
    #allocation6 [shape = 's32[1]{0}', space=sflag, size = 0x4, scoped, tag = 'scoped memory for tpu_custom_call.1']
    #allocation7 [shape = 'u8[4096]{0}', space=vmem, size = 0x1000, scoped, tag = 'output window, operand 0, single buffered']
    %9 = vsyncpa [#allocation3], 0
    %10 = vsyncpa [#allocation6], 0
    %11 = vsyncpa [#allocation4], 0
    // Predicated region
    $region2: #{tpu_custom_call.1} parent=1 // pred_check
      _
    $region3: #{tpu_custom_call.1} parent=1 // pred_check_branch
      %13 = sbr.rel (0) target = $region5
    $region4: #{tpu_custom_call.1} parent=1 // pred_region
      %s15 = ssub.s32 128, 128
      %16 = vsyncadd [#allocation3], %s15
      %s18 = sshll.u32 [#allocation2], 4
      %s19 = int_to_ptr.vmem [resolvable:$true] %s18
      %21 = dma.hbm_to_vmem [thread:$0]  %s0, 128, %s19, [#allocation3]
    $region5: #{tpu_custom_call.1} parent=1 // pred_fallthru
      _
    // Predicated region
    $region6: #{tpu_custom_call.1} parent=1 // pred_check
      _
    $region7: #{tpu_custom_call.1} parent=1 // pred_check_branch
      %23 = sbr.rel (0) target = $region9
    $region8: #{tpu_custom_call.1} parent=1 // pred_region
      %s25 = ssub.s32 2048, 2048
      %26 = vsyncadd [#allocation6], %s25
      %s27 = sshll.u32 [#allocation5], 4
      %s28 = int_to_ptr.vmem [resolvable:$true] %s27
      %33 = dma.hbm_to_vmem [thread:$0]  %s1, 2048, %s28, [#allocation6], 128, 128, 8
    $region9: #{tpu_custom_call.1} parent=1 // pred_fallthru
      _
    // Predicated region
    $region10: #{tpu_custom_call.1} parent=1 // pred_check
      _
    $region11: #{tpu_custom_call.1} parent=1 // pred_check_branch
      %35 = sbr.rel (0) target = $region13
    $region12: #{tpu_custom_call.1} parent=1 // pred_region
      _
    $region13: #{tpu_custom_call.1} parent=1 // pred_fallthru
      _
    // Predicated region
    $region14: #{tpu_custom_call.1} parent=1 // pred_check
      _
    $region15: #{tpu_custom_call.1} parent=1 // pred_check_branch
      %37 = sbr.rel (0) target = $region17
    $region16: #{tpu_custom_call.1} parent=1 // pred_region
      _
    $region17: #{tpu_custom_call.1} parent=1 // pred_fallthru
      _
    // Predicated region
    $region18: #{tpu_custom_call.1} parent=1 // pred_check
      _
    $region19: #{tpu_custom_call.1} parent=1 // pred_check_branch
      %39 = sbr.rel (0) target = $region21
    $region20: #{tpu_custom_call.1} parent=1 // pred_region
      %40 = dma.done [#allocation3], 128
    $region21: #{tpu_custom_call.1} parent=1 // pred_fallthru
      _
    // Predicated region
    $region22: #{tpu_custom_call.1} parent=1 // pred_check
      _
    $region23: #{tpu_custom_call.1} parent=1 // pred_check_branch
      %42 = sbr.rel (0) target = $region25
    $region24: #{tpu_custom_call.1} parent=1 // pred_region
      %43 = dma.done [#allocation6], 2048
    $region25: #{tpu_custom_call.1} parent=1 // pred_fallthru
      _
    %v44 = vld [vmem:[#allocation2] sm:$0xff]
    %v45 = vld [vmem:[#allocation5] sm:$0xff]
    %v46 = vld [vmem:[#allocation5 + $0x8] sm:$0xff]
    %v47 = vld [vmem:[#allocation5 + $0x10] sm:$0xff]
    %v48 = vld [vmem:[#allocation5 + $0x18] sm:$0xff]
    %v49 = vld [vmem:[#allocation5 + $0x20] sm:$0xff]
    %v50 = vld [vmem:[#allocation5 + $0x28] sm:$0xff]
    %v51 = vld [vmem:[#allocation5 + $0x30] sm:$0xff]
    %v52 = vld [vmem:[#allocation5 + $0x38] sm:$0xff]
    %v53 = vld [vmem:[#allocation5 + $0x40] sm:$0xff]
    %v54 = vld [vmem:[#allocation5 + $0x48] sm:$0xff]
    %v55 = vld [vmem:[#allocation5 + $0x50] sm:$0xff]
    %v56 = vld [vmem:[#allocation5 + $0x58] sm:$0xff]
    %v57 = vld [vmem:[#allocation5 + $0x60] sm:$0xff]
    %v58 = vld [vmem:[#allocation5 + $0x68] sm:$0xff]
    %v59 = vld [vmem:[#allocation5 + $0x70] sm:$0xff]
    %v60 = vld [vmem:[#allocation5 + $0x78] sm:$0xff]
    %61 = vmatprep.subr.mxu0 0.0
    %62 = vmatpush1.msra.mxu0 %v60
    %63 = vmatprep.subr.mxu0 0.0
    %64 = vmatpush1.msra.mxu0 %v59
    %65 = vmatprep.subr.mxu0 0.0
    %66 = vmatpush1.msra.mxu0 %v58
    %67 = vmatprep.subr.mxu0 0.0
    %68 = vmatpush1.msra.mxu0 %v57
    %69 = vmatprep.subr.mxu0 0.0
    %70 = vmatpush1.msra.mxu0 %v56
    %71 = vmatprep.subr.mxu0 0.0
    %72 = vmatpush1.msra.mxu0 %v55
    %73 = vmatprep.subr.mxu0 0.0
    %74 = vmatpush1.msra.mxu0 %v54
    %75 = vmatprep.subr.mxu0 0.0
    %76 = vmatpush1.msra.mxu0 %v53
    %77 = vmatprep.subr.mxu0 0.0
    %78 = vmatpush1.msra.mxu0 %v52
    %79 = vmatprep.subr.mxu0 0.0
    %80 = vmatpush1.msra.mxu0 %v51
    %81 = vmatprep.subr.mxu0 0.0
    %82 = vmatpush1.msra.mxu0 %v50
    %83 = vmatprep.subr.mxu0 0.0
    %84 = vmatpush1.msra.mxu0 %v49
    %85 = vmatprep.subr.mxu0 0.0
    %86 = vmatpush1.msra.mxu0 %v48
    %87 = vmatprep.subr.mxu0 0.0
    %88 = vmatpush1.msra.mxu0 %v47
    %89 = vmatprep.subr.mxu0 0.0
    %90 = vmatpush1.msra.mxu0 %v46
    %91 = vmatprep.subr.mxu0 0.0
    %92 = vmatpush1.msra.mxu0 %v45
    %93 = vmatprep.subr.mxu0 0.0
    %94 = vmatpush2.msra.mxu0 0.0
    %95 = vmatprep.subr.mxu0 0.0
    %96 = vmatpush2.msra.mxu0 0.0
    %97 = vmatprep.subr.mxu0 0.0
    %98 = vmatpush2.msra.mxu0 0.0
    %99 = vmatprep.subr.mxu0 0.0
    %100 = vmatpush2.msra.mxu0 0.0
    %101 = vmatprep.subr.mxu0 0.0
    %102 = vmatpush2.msra.mxu0 0.0
    %103 = vmatprep.subr.mxu0 0.0
    %104 = vmatpush2.msra.mxu0 0.0
    %105 = vmatprep.subr.mxu0 0.0
    %106 = vmatpush2.msra.mxu0 0.0
    %107 = vmatprep.subr.mxu0 0.0
    %108 = vmatpush2.msra.mxu0 0.0
    %109 = vmatprep.subr.mxu0 0.0
    %110 = vmatpush2.msra.mxu0 0.0
    %111 = vmatprep.subr.mxu0 0.0
    %112 = vmatpush2.msra.mxu0 0.0
    %113 = vmatprep.subr.mxu0 0.0
    %114 = vmatpush2.msra.mxu0 0.0
    %115 = vmatprep.subr.mxu0 0.0
    %116 = vmatpush2.msra.mxu0 0.0
    %117 = vmatprep.subr.mxu0 0.0
    %118 = vmatpush2.msra.mxu0 0.0
    %119 = vmatprep.subr.mxu0 0.0
    %120 = vmatpush2.msra.mxu0 0.0
    %121 = vmatprep.subr.mxu0 0.0
    %122 = vmatpush2.msra.mxu0 0.0
    %123 = vmatprep.subr.mxu0 0.0
    %124 = vmatpush2.msra.mxu0 0.0
    %125 = vmatprep.mubr.f32.mxu0 0.0
    %126 = vmatmul.mubr.f32.gmra.mxu0 %v44
    %v127 = vpop.f32.mrf.mxu0
    %v128 = vadd.f32 0.0, %v127
    %v129 = vpop.f32.mrf.mxu0
    %130 = vdwg.mxu0
    %v131 = vrot.slane %v128, 4
    %v132 = vadd.f32 %v128, %v131
    %v133 = vrot.slane %v132, 2
    %v134 = vadd.f32 %v132, %v133
    %v135 = vrot.slane %v134, 1
    %v136 = vadd.f32 %v134, %v135
    %v137 = vmul.f32 %v136, 0.125
    %v138 = vmul.f32 %v128, %v128
    %v139 = vrot.slane %v138, 4
    %v140 = vadd.f32 %v138, %v139
    %v141 = vrot.slane %v140, 2
    %v142 = vadd.f32 %v140, %v141
    %v143 = vrot.slane %v142, 1
    %v144 = vadd.f32 %v142, %v143
    %v145 = vmul.f32 %v144, 0.125
    %v146 = vmul.f32 %v137, %v137
    %v147 = vsub.f32 %v145, %v146
    %v148 = vmax.f32 %v147, 0.0
    %v149 = vadd.f32 %v148, 1e-05
    %v150 = vrsqrt.pop %v149
    %v151 = vld [vmem:[%s2] sm:$0x1]
    %v152 = vmul.f32 %v150, %v151
    %v153 = vld [vmem:[%s3] sm:$0x1]
    %v154 = vmul.f32 %v137, %v152
    %v155 = vsub.f32 %v153, %v154
    %v156 = vlaneseq
    %v157 = vshrl.u32 %v156, 7
    %v158 = vsub.s32 0, %v157
    %v159 = vrot.slane %v152, %v158
    %v160 = vmul.f32 %v128, %v159
    %v162 = vlaneseq
    %v163 = vshrl.u32 %v162, 7
    %v164 = vsub.s32 0, %v163
    %v165 = vrot.slane %v155, %v164
    %v167 = vadd.f32 %v160, %v165
    %s168 = smul.u32 0, 128
    %s169 = sshra.s32 %s168, 7
    %s170 = sand.u32 %s168, 127
    %s171 = scalar_lea.vmem [#allocation2], %s169
    %v172 = vld [vmem:[%s171] sm:$0xff]
    %v173 = vadd.f32 %v167, %v172
    %174 = vst [vmem:[#allocation7] sm:$0xff] %v173
    // Predicated region
    $region26: #{tpu_custom_call.1} parent=1 // pred_check
      _
    $region27: #{tpu_custom_call.1} parent=1 // pred_check_branch
      %176 = sbr.rel (0) target = $region29
    $region28: #{tpu_custom_call.1} parent=1 // pred_region
      %s178 = ssub.s32 128, 128
      %179 = vsyncadd [#allocation4], %s178
      %s181 = sshll.u32 [#allocation7], 4
      %s182 = int_to_ptr.vmem [resolvable:$true] %s181
      %184 = dma.vmem_to_hbm [thread:$0]  %s182, 128, %s4, [#allocation4]
    $region29: #{tpu_custom_call.1} parent=1 // pred_fallthru
      _
    // Predicated region
    $region30: #{tpu_custom_call.1} parent=1 // pred_check
      _
    $region31: #{tpu_custom_call.1} parent=1 // pred_check_branch
      %186 = sbr.rel (0) target = $region33
    $region32: #{tpu_custom_call.1} parent=1 // pred_region
      %187 = dma.done [#allocation4], 128
    $region33: #{tpu_custom_call.1} parent=1 // pred_fallthru
      _
    %188 = vsyncpa [#allocation3], 1
    %189 = vsyncpa [#allocation6], 1
    %190 = vsyncpa [#allocation4], 1

// kernel: tpu_custom_call.1
$region0: #{tpu_custom_call.1}
  #allocation0 [shape = 'u32[]', space=smem, size = 0x4, offset = 0x4, fixed_abs, tag = 'smem constant byte address 0x4 - core index']
  #allocation1 [shape = 'u32[144,128]{1,0:T(1,128)}', space=vmem, size = 0x12000, scoped, tag = 'internal scratch']
  %s0 = inlined_call_operand.hbm [shape: f32[8,128], index: 0, kind: input, shape index: {}]
  %s1 = inlined_call_operand.hbm [shape: f32[128,128], index: 1, kind: input, shape index: {}]
  %s2 = inlined_call_operand.vmem [shape: f32[1,128], index: 2, kind: input, shape index: {}]
  %s3 = inlined_call_operand.vmem [shape: f32[1,128], index: 3, kind: input, shape index: {}]
  %s4 = inlined_call_operand.hbm [shape: f32[8,128], index: 4, kind: output, shape index: {}]
  %s5 = sld [smem:[#allocation0]]
  $region34: #{tpu_custom_call.1} parent=0
    _
  %s7 = ssub.s32 1, %s5
  %s8 = scalar_select 0, %s7, %s5
  $region1: #{tpu_custom_call.1} parent=0
    #allocation2 [shape = 'u8[4096]{0}', space=vmem, size = 0x1000, scoped, tag = 'input window, operand 0, single buffered']
    #allocation3 [shape = 's32[1]{0}', space=sflag, size = 0x4, scoped, tag = 'scoped memory for tpu_custom_call.1']
    #allocation4 [shape = 's32[1]{0}', space=sflag, size = 0x4, scoped, tag = 'scoped memory for tpu_custom_call.1']
    #allocation5 [shape = 'u8[65536]{0}', space=vmem, size = 0x10000, scoped, tag = 'input window, operand 1, single buffered']
    #allocation6 [shape = 's32[1]{0}', space=sflag, size = 0x4, scoped, tag = 'scoped memory for tpu_custom_call.1']
    #allocation7 [shape = 'u8[4096]{0}', space=vmem, size = 0x1000, scoped, tag = 'output window, operand 0, single buffered']
    %9 = vsyncpa [#allocation3], 0
    %10 = vsyncpa [#allocation6], 0
    %11 = vsyncpa [#allocation4], 0
    // Predicated region
    $region2: #{tpu_custom_call.1} parent=1 // pred_check
      _
    $region3: #{tpu_custom_call.1} parent=1 // pred_check_branch
      %13 = sbr.rel (0) target = $region5
    $region4: #{tpu_custom_call.1} parent=1 // pred_region
      %s15 = ssub.s32 128, 128
      %16 = vsyncadd [#allocation3], %s15
      %s18 = sshll.u32 [#allocation2], 4
      %s19 = int_to_ptr.vmem [resolvable:$true] %s18
      %21 = dma.hbm_to_vmem [thread:$0]  %s0, 128, %s19, [#allocation3]
    $region5: #{tpu_custom_call.1} parent=1 // pred_fallthru
      _
    // Predicated region
    $region6: #{tpu_custom_call.1} parent=1 // pred_check
      _
    $region7: #{tpu_custom_call.1} parent=1 // pred_check_branch
      %23 = sbr.rel (0) target = $region9
    $region8: #{tpu_custom_call.1} parent=1 // pred_region
      %s25 = ssub.s32 2048, 2048
      %26 = vsyncadd [#allocation6], %s25
      %s27 = sshll.u32 [#allocation5], 4
      %s28 = int_to_ptr.vmem [resolvable:$true] %s27
      %33 = dma.hbm_to_vmem [thread:$0]  %s1, 2048, %s28, [#allocation6], 128, 128, 8
    $region9: #{tpu_custom_call.1} parent=1 // pred_fallthru
      _
    // Predicated region
    $region10: #{tpu_custom_call.1} parent=1 // pred_check
      _
    $region11: #{tpu_custom_call.1} parent=1 // pred_check_branch
      %35 = sbr.rel (0) target = $region13
    $region12: #{tpu_custom_call.1} parent=1 // pred_region
      _
    $region13: #{tpu_custom_call.1} parent=1 // pred_fallthru
      _
    // Predicated region
    $region14: #{tpu_custom_call.1} parent=1 // pred_check
      _
    $region15: #{tpu_custom_call.1} parent=1 // pred_check_branch
      %37 = sbr.rel (0) target = $region17
    $region16: #{tpu_custom_call.1} parent=1 // pred_region
      _
    $region17: #{tpu_custom_call.1} parent=1 // pred_fallthru
      _
    // Predicated region
    $region18: #{tpu_custom_call.1} parent=1 // pred_check
      _
    $region19: #{tpu_custom_call.1} parent=1 // pred_check_branch
      %39 = sbr.rel (0) target = $region21
    $region20: #{tpu_custom_call.1} parent=1 // pred_region
      %40 = dma.done [#allocation3], 128
    $region21: #{tpu_custom_call.1} parent=1 // pred_fallthru
      _
    // Predicated region
    $region22: #{tpu_custom_call.1} parent=1 // pred_check
      _
    $region23: #{tpu_custom_call.1} parent=1 // pred_check_branch
      %42 = sbr.rel (0) target = $region25
    $region24: #{tpu_custom_call.1} parent=1 // pred_region
      %43 = dma.done [#allocation6], 2048
    $region25: #{tpu_custom_call.1} parent=1 // pred_fallthru
      _
    %v44 = vld [vmem:[#allocation2] sm:$0xff]
    %v45 = vld [vmem:[#allocation5] sm:$0xff]
    %v46 = vld [vmem:[#allocation5 + $0x8] sm:$0xff]
    %v47 = vld [vmem:[#allocation5 + $0x10] sm:$0xff]
    %v48 = vld [vmem:[#allocation5 + $0x18] sm:$0xff]
    %v49 = vld [vmem:[#allocation5 + $0x20] sm:$0xff]
    %v50 = vld [vmem:[#allocation5 + $0x28] sm:$0xff]
    %v51 = vld [vmem:[#allocation5 + $0x30] sm:$0xff]
    %v52 = vld [vmem:[#allocation5 + $0x38] sm:$0xff]
    %v53 = vld [vmem:[#allocation5 + $0x40] sm:$0xff]
    %v54 = vld [vmem:[#allocation5 + $0x48] sm:$0xff]
    %v55 = vld [vmem:[#allocation5 + $0x50] sm:$0xff]
    %v56 = vld [vmem:[#allocation5 + $0x58] sm:$0xff]
    %v57 = vld [vmem:[#allocation5 + $0x60] sm:$0xff]
    %v58 = vld [vmem:[#allocation5 + $0x68] sm:$0xff]
    %v59 = vld [vmem:[#allocation5 + $0x70] sm:$0xff]
    %v60 = vld [vmem:[#allocation5 + $0x78] sm:$0xff]
    %61 = vmatprep.subr.mxu0 0.0
    %62 = vmatpush1.msra.mxu0 %v60
    %63 = vmatprep.subr.mxu0 0.0
    %64 = vmatpush1.msra.mxu0 %v59
    %65 = vmatprep.subr.mxu0 0.0
    %66 = vmatpush1.msra.mxu0 %v58
    %67 = vmatprep.subr.mxu0 0.0
    %68 = vmatpush1.msra.mxu0 %v57
    %69 = vmatprep.subr.mxu0 0.0
    %70 = vmatpush1.msra.mxu0 %v56
    %71 = vmatprep.subr.mxu0 0.0
    %72 = vmatpush1.msra.mxu0 %v55
    %73 = vmatprep.subr.mxu0 0.0
    %74 = vmatpush1.msra.mxu0 %v54
    %75 = vmatprep.subr.mxu0 0.0
    %76 = vmatpush1.msra.mxu0 %v53
    %77 = vmatprep.subr.mxu0 0.0
    %78 = vmatpush1.msra.mxu0 %v52
    %79 = vmatprep.subr.mxu0 0.0
    %80 = vmatpush1.msra.mxu0 %v51
    %81 = vmatprep.subr.mxu0 0.0
    %82 = vmatpush1.msra.mxu0 %v50
    %83 = vmatprep.subr.mxu0 0.0
    %84 = vmatpush1.msra.mxu0 %v49
    %85 = vmatprep.subr.mxu0 0.0
    %86 = vmatpush1.msra.mxu0 %v48
    %87 = vmatprep.subr.mxu0 0.0
    %88 = vmatpush1.msra.mxu0 %v47
    %89 = vmatprep.subr.mxu0 0.0
    %90 = vmatpush1.msra.mxu0 %v46
    %91 = vmatprep.subr.mxu0 0.0
    %92 = vmatpush1.msra.mxu0 %v45
    %93 = vmatprep.subr.mxu0 0.0
    %94 = vmatpush2.msra.mxu0 0.0
    %95 = vmatprep.subr.mxu0 0.0
    %96 = vmatpush2.msra.mxu0 0.0
    %97 = vmatprep.subr.mxu0 0.0
    %98 = vmatpush2.msra.mxu0 0.0
    %99 = vmatprep.subr.mxu0 0.0
    %100 = vmatpush2.msra.mxu0 0.0
    %101 = vmatprep.subr.mxu0 0.0
    %102 = vmatpush2.msra.mxu0 0.0
    %103 = vmatprep.subr.mxu0 0.0
    %104 = vmatpush2.msra.mxu0 0.0
    %105 = vmatprep.subr.mxu0 0.0
    %106 = vmatpush2.msra.mxu0 0.0
    %107 = vmatprep.subr.mxu0 0.0
    %108 = vmatpush2.msra.mxu0 0.0
    %109 = vmatprep.subr.mxu0 0.0
    %110 = vmatpush2.msra.mxu0 0.0
    %111 = vmatprep.subr.mxu0 0.0
    %112 = vmatpush2.msra.mxu0 0.0
    %113 = vmatprep.subr.mxu0 0.0
    %114 = vmatpush2.msra.mxu0 0.0
    %115 = vmatprep.subr.mxu0 0.0
    %116 = vmatpush2.msra.mxu0 0.0
    %117 = vmatprep.subr.mxu0 0.0
    %118 = vmatpush2.msra.mxu0 0.0
    %119 = vmatprep.subr.mxu0 0.0
    %120 = vmatpush2.msra.mxu0 0.0
    %121 = vmatprep.subr.mxu0 0.0
    %122 = vmatpush2.msra.mxu0 0.0
    %123 = vmatprep.subr.mxu0 0.0
    %124 = vmatpush2.msra.mxu0 0.0
    %125 = vmatprep.mubr.f32.mxu0 0.0
    %126 = vmatmul.mubr.f32.gmra.mxu0 %v44
    %v127 = vpop.f32.mrf.mxu0
    %v128 = vadd.f32 0.0, %v127
    %v129 = vpop.f32.mrf.mxu0
    %130 = vdwg.mxu0
    %v131 = vrot.slane %v128, 4
    %v132 = vadd.f32 %v128, %v131
    %v133 = vrot.slane %v132, 2
    %v134 = vadd.f32 %v132, %v133
    %v135 = vrot.slane %v134, 1
    %v136 = vadd.f32 %v134, %v135
    %v137 = vmul.f32 %v136, 0.125
    %v138 = vmul.f32 %v128, %v128
    %v139 = vrot.slane %v138, 4
    %v140 = vadd.f32 %v138, %v139
    %v141 = vrot.slane %v140, 2
    %v142 = vadd.f32 %v140, %v141
    %v143 = vrot.slane %v142, 1
    %v144 = vadd.f32 %v142, %v143
    %v145 = vmul.f32 %v144, 0.125
    %v146 = vmul.f32 %v137, %v137
    %v147 = vsub.f32 %v145, %v146
    %v148 = vmax.f32 %v147, 0.0
    %v149 = vadd.f32 %v148, 1e-05
    %v150 = vrsqrt.pop %v149
    %v151 = vld [vmem:[%s2] sm:$0x1]
    %v152 = vmul.f32 %v150, %v151
    %v153 = vld [vmem:[%s3] sm:$0x1]
    %v154 = vmul.f32 %v137, %v152
    %v155 = vsub.f32 %v153, %v154
    %v156 = vlaneseq
    %v157 = vshrl.u32 %v156, 7
    %v158 = vsub.s32 0, %v157
    %v159 = vrot.slane %v152, %v158
    %v160 = vmul.f32 %v128, %v159
    %v162 = vlaneseq
    %v163 = vshrl.u32 %v162, 7
    %v164 = vsub.s32 0, %v163
    %v165 = vrot.slane %v155, %v164
    %v167 = vadd.f32 %v160, %v165
    %s168 = smul.u32 0, 128
    %s169 = sshra.s32 %s168, 7
    %s170 = sand.u32 %s168, 127
    %s171 = scalar_lea.vmem [#allocation2], %s169
    %v172 = vld [vmem:[%s171] sm:$0xff]
    %v173 = vadd.f32 %v167, %v172
    %174 = vst [vmem:[#allocation7] sm:$0xff] %v173
    // Predicated region
    $region26: #{tpu_custom_call.1} parent=1 // pred_check
      _
    $region27: #{tpu_custom_call.1} parent=1 // pred_check_branch
      %176 = sbr.rel (0) target = $region29
    $region28: #{tpu_custom_call.1} parent=1 // pred_region
      %s178 = ssub.s32 128, 128
      %179 = vsyncadd [#allocation4], %s178
      %s181 = sshll.u32 [#allocation7], 4
      %s182 = int_to_ptr.vmem [resolvable:$true] %s181
      %184 = dma.vmem_to_hbm [thread:$0]  %s182, 128, %s4, [#allocation4]
    $region29: #{tpu_custom_call.1} parent=1 // pred_fallthru
      _
    // Predicated region
    $region30: #{tpu_custom_call.1} parent=1 // pred_check
      _
    $region31: #{tpu_custom_call.1} parent=1 // pred_check_branch
      %186 = sbr.rel (0) target = $region33
    $region32: #{tpu_custom_call.1} parent=1 // pred_region
      %187 = dma.done [#allocation4], 128
    $region33: #{tpu_custom_call.1} parent=1 // pred_fallthru
      _
    %188 = vsyncpa [#allocation3], 1
    %189 = vsyncpa [#allocation6], 1
    %190 = vsyncpa [#allocation4], 1

</llo_original>
